<compile_context>
chip_gen: v7x
topology: tpu7x:2x2x1
jax: 0.10.0
libtpu: 0.0.40
codegen_flags: <defaults>
</compile_context>

<pallas_src>
from functools import partial

import jax
import jax.numpy as jnp
from jax.experimental import pallas as pl
from jax.experimental.pallas import tpu as pltpu

_LANE = 128
_MIN_TILE = 64 * 1024          # lanes; >= 1 MiB of f32 input per grid step
_DEFAULT_TILE = 128 * 1024     # lanes; ~2 MiB input per step, ~5 MiB VMEM 2-buf


def _round_up(n, m):
    return ((n + m - 1) // m) * m


def _cdiv(a, b):
    return (a + b - 1) // b


def _make_kernel(in_features):
    def kernel(w_ref, b_ref, xT_ref, o_ref):
        # w_ref : (IN,) f32 in SMEM  -- folded weight  w1 * w2
        # b_ref : (1,)  f32 in SMEM  -- folded bias    b1 * w2 + b2
        # xT_ref: (IN, TILE_B) in VMEM -- batch on the lane axis
        # o_ref : (1,  TILE_B) in VMEM -- lane-dense output row
        x = xT_ref[...].astype(jnp.float32)               # (IN, TILE_B)
        acc = x[0:1, :] * w_ref[0]
        for k in range(1, in_features):                   # unrolled (IN = 4)
            acc = acc + x[k:k + 1, :] * w_ref[k]
        o_ref[...] = (acc + b_ref[0]).astype(o_ref.dtype)
    return kernel


@partial(jax.jit, static_argnames=("tile_b",))
def mynet_forward(x, w1, b1, w2, b2, *, tile_b=_DEFAULT_TILE):
    """Forward of MyNet: f2(f1(x)), f1 = Linear(4,1), f2 = Linear(1,1)."""
    B, IN = x.shape
    dtype = x.dtype

    # Fold the second affine into the first, keeping the params in f32
    # (SMEM scalars) independent of the activation dtype.
    w_f = (w1.astype(jnp.float32) * w2.astype(jnp.float32)).reshape(IN)
    b_f = (b1.astype(jnp.float32) * w2.astype(jnp.float32)
           + b2.astype(jnp.float32)).reshape(1)

    # Lane-dense layout: batch on the last (lane) axis, padded only to a
    # multiple of 128.  Under jit the transpose+pad lower as one fusion.
    B_pad = _round_up(max(B, _LANE), _LANE)
    xT = jnp.transpose(x)                                 # (IN, B)
    if B_pad != B:
        xT = jnp.pad(xT, ((0, 0), (0, B_pad - B)))

    # Tile selection: as large as possible (bandwidth-bound), but keep at
    # least 2 grid steps when the batch is big enough so both v7x
    # TensorCores get work via dimension_semantics=("parallel",).
    tile = min(tile_b, B_pad)
    if tile >= B_pad and B_pad >= 2 * _MIN_TILE:
        tile = _round_up(_cdiv(B_pad, 2), _LANE)
    tile = max(tile, _LANE)
    grid = _cdiv(B_pad, tile)                             # ragged last block OK

    itemsize = jnp.dtype(dtype).itemsize
    cost = pl.CostEstimate(
        flops=2 * IN * B_pad,
        transcendentals=0,
        bytes_accessed=B_pad * (IN + 1) * itemsize,
    )

    out = pl.pallas_call(
        _make_kernel(IN),
        out_shape=jax.ShapeDtypeStruct((1, B_pad), dtype),
        grid=(grid,),
        in_specs=[
            pl.BlockSpec(memory_space=pltpu.SMEM),        # folded weight (IN,)
            pl.BlockSpec(memory_space=pltpu.SMEM),        # folded bias   (1,)
            pl.BlockSpec((IN, tile), lambda i: (0, i)),   # x^T lane tile
        ],
        out_specs=pl.BlockSpec((1, tile), lambda i: (0, i)),
        compiler_params=pltpu.CompilerParams(
            dimension_semantics=("parallel",),
            vmem_limit_bytes=32 * 1024 * 1024,
        ),
        cost_estimate=cost,
    )(w_f, b_f, xT)

    # Drop lane padding and restore PyTorch's (B, 1) output layout.
    return out[0, :B].reshape(B, 1)


if __name__ == "__main__":
    key = jax.random.PRNGKey(0)

    IN = 4
    # Parameters (deterministic, per MyNet.weight_init for f1; fixed values
    # for f2, which PyTorch would kaiming-init non-deterministically):
    w1 = jnp.full((1, IN), 8.0, dtype=jnp.float32)   # f1.weight.fill_(8.0)
    b1 = jnp.full((1, 1), 2.0, dtype=jnp.float32)    # f1.bias.fill_(2.0)
    w2 = jnp.full((1, 1), 0.5, dtype=jnp.float32)    # f2.weight (synthetic)
    b2 = jnp.full((1, 1), -1.0, dtype=jnp.float32)   # f2.bias   (synthetic)

    ok = True
    for B in (8, 300):   # small batch + one that exercises the pad/slice path
        x = jax.random.normal(jax.random.fold_in(key, B), (B, IN),
                              dtype=jnp.float32)
        out = jax.block_until_ready(mynet_forward(x, w1, b1, w2, b2))
        ref = (x @ w1.T + b1) * w2 + b2          # pure-JAX reference
        ok &= out.shape == (B, 1)
        ok &= bool(jnp.allclose(out, ref, atol=1e-5, rtol=1e-5))

    assert ok, "mismatch vs reference"
    print("KERNEL_OK")
</pallas_src>

<mosaic_0001>
module attributes {stable_mosaic.version = 11 : i64} {
  func.func @kernel(%arg0: i32, %arg1: memref<4xf32, #tpu.memory_space<smem>>, %arg2: memref<1xf32, #tpu.memory_space<smem>>, %arg3: memref<4x128xf32, #tpu.memory_space<vmem>>, %arg4: memref<1x128xf32, #tpu.memory_space<vmem>>) attributes {dimension_semantics = [#tpu.dimension_semantics<parallel>], iteration_bounds = array<i64: 1>, scalar_prefetch = 0 : i64, scratch_operands = 0 : i64, tpu.core_type = #tpu.core_type<tc>, window_params = [{transform_indices = @transform_0, window_bounds = array<i64: 4>}, {transform_indices = @transform_1, window_bounds = array<i64: 1>}, {transform_indices = @transform_2, window_bounds = array<i64: 4, 128>}, {transform_indices = @transform_3, window_bounds = array<i64: 1, 128>}]} {
    %c0 = arith.constant 0 : index
    %c0_0 = arith.constant 0 : index
    %0 = vector.load %arg3[%c0, %c0_0] : memref<4x128xf32, #tpu.memory_space<vmem>>, vector<4x128xf32>
    %1 = vector.extract_strided_slice %0 {offsets = [0, 0], sizes = [1, 128], strides = [1, 1]} : vector<4x128xf32> to vector<1x128xf32>
    %c0_1 = arith.constant 0 : index
    %2 = memref.load %arg1[%c0_1] : memref<4xf32, #tpu.memory_space<smem>>
    %3 = vector.broadcast %2 : f32 to vector<1x128xf32>
    %4 = arith.mulf %1, %3 : vector<1x128xf32>
    %5 = vector.extract_strided_slice %0 {offsets = [1, 0], sizes = [1, 128], strides = [1, 1]} : vector<4x128xf32> to vector<1x128xf32>
    %c1 = arith.constant 1 : index
    %6 = memref.load %arg1[%c1] : memref<4xf32, #tpu.memory_space<smem>>
    %7 = vector.broadcast %6 : f32 to vector<1x128xf32>
    %8 = arith.mulf %5, %7 : vector<1x128xf32>
    %9 = arith.addf %4, %8 : vector<1x128xf32>
    %10 = vector.extract_strided_slice %0 {offsets = [2, 0], sizes = [1, 128], strides = [1, 1]} : vector<4x128xf32> to vector<1x128xf32>
    %c2 = arith.constant 2 : index
    %11 = memref.load %arg1[%c2] : memref<4xf32, #tpu.memory_space<smem>>
    %12 = vector.broadcast %11 : f32 to vector<1x128xf32>
    %13 = arith.mulf %10, %12 : vector<1x128xf32>
    %14 = arith.addf %9, %13 : vector<1x128xf32>
    %15 = vector.extract_strided_slice %0 {offsets = [3, 0], sizes = [1, 128], strides = [1, 1]} : vector<4x128xf32> to vector<1x128xf32>
    %c3 = arith.constant 3 : index
    %16 = memref.load %arg1[%c3] : memref<4xf32, #tpu.memory_space<smem>>
    %17 = vector.broadcast %16 : f32 to vector<1x128xf32>
    %18 = arith.mulf %15, %17 : vector<1x128xf32>
    %19 = arith.addf %14, %18 : vector<1x128xf32>
    %c0_2 = arith.constant 0 : index
    %20 = memref.load %arg2[%c0_2] : memref<1xf32, #tpu.memory_space<smem>>
    %21 = vector.broadcast %20 : f32 to vector<1x128xf32>
    %22 = arith.addf %19, %21 : vector<1x128xf32>
    %c0_3 = arith.constant 0 : index
    %c0_4 = arith.constant 0 : index
    %23 = vector.load %arg4[%c0_3, %c0_4] : memref<1x128xf32, #tpu.memory_space<vmem>>, vector<1x128xf32>
    tpu.vector_store %arg4[%c0_3, %c0_4], %22 {strides = array<i32>} : memref<1x128xf32, #tpu.memory_space<vmem>>, vector<1x128xf32>,
    return
  }
  func.func @transform_0(%arg0: i32) -> i32 {
    %c0_i32 = arith.constant 0 : i32
    %c0_i32_0 = arith.constant 0 : i32
    return %c0_i32 : i32
  }
  func.func @transform_1(%arg0: i32) -> i32 {
    %c0_i32 = arith.constant 0 : i32
    %c0_i32_0 = arith.constant 0 : i32
    return %c0_i32 : i32
  }
  func.func @transform_2(%arg0: i32) -> (i32, i32) {
    %c0_i32 = arith.constant 0 : i32
    %c0_i32_0 = arith.constant 0 : i32
    return %c0_i32, %arg0 : i32, i32
  }
  func.func @transform_3(%arg0: i32) -> (i32, i32) {
    %c0_i32 = arith.constant 0 : i32
    %c0_i32_0 = arith.constant 0 : i32
    return %c0_i32, %arg0 : i32, i32
  }
}

</mosaic_0001>

<llo_original>
// kernel: mynet_forward.1
$region0: #{mynet_forward.1}
  #allocation0 [shape = 'u32[]', space=smem, size = 0x4, offset = 0x4, fixed_abs, tag = 'smem constant byte address 0x4 - core index']
  #allocation1 [shape = 'u32[144,128]{1,0:T(1,128)}', space=vmem, size = 0x12000, scoped, tag = 'internal scratch']
  #allocation2 [shape = 'f32[1]{0:T(128)S(6)}', space=smem, size = 0x200, scoped, tag = 'scoped memory for mynet_forward.1']
  %s0 = inlined_call_operand.vmem [shape: f32[4], index: 0, kind: input, shape index: {}]
  %s1 = inlined_call_operand.<no memory space> [shape: f32[1], index: 1, kind: input, shape index: {}]
  %s2 = inlined_call_operand.vmem [shape: f32[4,128], index: 2, kind: input, shape index: {}]
  %s3 = inlined_call_operand.vmem [shape: f32[1,128], index: 3, kind: output, shape index: {}]
  %s4 = sld [smem:[#allocation0]]
  $region26: #{mynet_forward.1} parent=0
    _
  %s6 = ssub.s32 1, %s4
  %s7 = scalar_select 0, %s6, %s4
  %8 = sst [smem:[#allocation2]] %s1
  $region1: #{mynet_forward.1} parent=0
    #allocation3 [shape = 'u8[512]{0}', space=smem, size = 0x200, scoped, tag = 'input window, operand 0, single buffered']
    #allocation4 [shape = 's32[1]{0}', space=sflag, size = 0x4, scoped, tag = 'scoped memory for mynet_forward.1']
    %9 = vsyncpa [#allocation4], 0
    // Predicated region
    $region2: #{mynet_forward.1} parent=1 // pred_check
      _
    $region3: #{mynet_forward.1} parent=1 // pred_check_branch
      %11 = sbr.rel (0) target = $region5
    $region4: #{mynet_forward.1} parent=1 // pred_region
      %s13 = ssub.s32 16, 16
      %14 = vsyncadd [#allocation4], %s13
      %s16 = sshll.u32 %s0, 4
      %s17 = int_to_ptr.vmem [resolvable:$true] %s16
      %19 = dma.vmem_to_smem %s17, 16, [#allocation3], [#allocation4]
    $region5: #{mynet_forward.1} parent=1 // pred_fallthru
      _
    // Predicated region
    $region6: #{mynet_forward.1} parent=1 // pred_check
      _
    $region7: #{mynet_forward.1} parent=1 // pred_check_branch
      %21 = sbr.rel (0) target = $region9
    $region8: #{mynet_forward.1} parent=1 // pred_region
      _
    $region9: #{mynet_forward.1} parent=1 // pred_fallthru
      _
    // Predicated region
    $region10: #{mynet_forward.1} parent=1 // pred_check
      _
    $region11: #{mynet_forward.1} parent=1 // pred_check_branch
      %23 = sbr.rel (0) target = $region13
    $region12: #{mynet_forward.1} parent=1 // pred_region
      _
    $region13: #{mynet_forward.1} parent=1 // pred_fallthru
      _
    // Predicated region
    $region14: #{mynet_forward.1} parent=1 // pred_check
      _
    $region15: #{mynet_forward.1} parent=1 // pred_check_branch
      %25 = sbr.rel (0) target = $region17
    $region16: #{mynet_forward.1} parent=1 // pred_region
      %26 = dma.done [#allocation4], 16
    $region17: #{mynet_forward.1} parent=1 // pred_fallthru
      _
    %27 = sfence
    %v28 = vld [vmem:[%s2] sm:$0xf]
    %s29 = sld [smem:[#allocation3]]
    %v30 = vstv %s29
    %v31 = vmul.f32 %v28, %v30
    %s32 = sld [smem:[#allocation3 + $0x1]]
    %v33 = vstv %s32
    %v34 = vmul.f32 %v28, %v33
    %v36 = vrot.slane %v34, 1
    %v38 = vadd.f32 %v31, %v36
    %s39 = sld [smem:[#allocation3 + $0x2]]
    %v40 = vstv %s39
    %v41 = vmul.f32 %v28, %v40
    %v43 = vrot.slane %v41, 2
    %v45 = vadd.f32 %v38, %v43
    %s46 = sld [smem:[#allocation3 + $0x3]]
    %v47 = vstv %s46
    %v48 = vmul.f32 %v28, %v47
    %v50 = vrot.slane %v48, 3
    %v52 = vadd.f32 %v45, %v50
    %s53 = sld [smem:[#allocation2]]
    %v54 = vstv %s53
    %v55 = vadd.f32 %v52, %v54
    %56 = vst [vmem:[%s3] sm:$0x1] %v55
    // Predicated region
    $region18: #{mynet_forward.1} parent=1 // pred_check
      _
    $region19: #{mynet_forward.1} parent=1 // pred_check_branch
      %58 = sbr.rel (0) target = $region21
    $region20: #{mynet_forward.1} parent=1 // pred_region
      _
    $region21: #{mynet_forward.1} parent=1 // pred_fallthru
      _
    // Predicated region
    $region22: #{mynet_forward.1} parent=1 // pred_check
      _
    $region23: #{mynet_forward.1} parent=1 // pred_check_branch
      %60 = sbr.rel (0) target = $region25
    $region24: #{mynet_forward.1} parent=1 // pred_region
      _
    $region25: #{mynet_forward.1} parent=1 // pred_fallthru
      _
    %61 = vsyncpa [#allocation4], 1

</llo_original>
